<compile_context>
chip_gen: v7x
topology: tpu7x:2x2x1
jax: 0.10.0
libtpu: 0.0.40
codegen_flags: <defaults>
</compile_context>

<pallas_src>
import functools

import jax
import jax.numpy as jnp
from jax.experimental import pallas as pl
from jax.experimental.pallas import tpu as pltpu

LN_EPS = 1e-5


def _round_up(n: int, m: int) -> int:
    return ((n + m - 1) // m) * m


def _res_stack_kernel(x_ref, wt_ref, p_ref, o_ref, *,
                      n_res_layers: int, true_d: int, split: bool):
    """One row-tile of the full shared-weight residual stack.

    x_ref  : (TILE_N, D_pad)  input activations (input dtype)
    wt_ref : (D_pad, D_pad)   Linear weight, already transposed (W.T), compute
                              dtype, zero-padded in lanes >= true_d
    p_ref  : (3, D_pad)       packed [bias; ln_gamma; ln_beta], f32, zero-padded
    o_ref  : (TILE_N, D_pad)  output
    """
    wt = wt_ref[...]                      # resident MXU operand (compute dtype)
    b = p_ref[0:1, :]                     # (1, D_pad) f32   (hoisted, loaded once)
    g = p_ref[1:2, :]
    beta = p_ref[2:3, :]
    inv_d = jnp.float32(1.0 / true_d)

    def res_block(x):
        # x: (rows, D_pad) f32 residual carry.  Padded lanes stay exactly 0:
        # W / bias / gamma / beta are zero there, so h, hn and ReLU are 0 too.
        h = jnp.dot(x.astype(wt.dtype), wt,
                    preferred_element_type=jnp.float32) + b          # Linear
        # LayerNorm over the TRUE feature width via two independent reductions.
        mu = jnp.sum(h, axis=-1, keepdims=True) * inv_d
        ex2 = jnp.sum(h * h, axis=-1, keepdims=True) * inv_d
        var = jnp.maximum(ex2 - mu * mu, 0.0)                        # biased var
        hn = (h - mu) * jax.lax.rsqrt(var + LN_EPS) * g + beta
        return x + jnp.maximum(hn, 0.0)                              # residual + ReLU

    tile_rows = x_ref.shape[0]
    if split:
        # Two independent row sub-tiles carried through the layer loop: sub-tile
        # B's matmul issues on the MXU while sub-tile A's LayerNorm drains
        # through XLU/EUP/VPU (and vice versa).
        half = tile_rows // 2
        carry = (x_ref[0:half, :].astype(jnp.float32),
                 x_ref[half:tile_rows, :].astype(jnp.float32))

        def layer(_, c):
            return (res_block(c[0]), res_block(c[1]))

        if n_res_layers <= 8:
            for _ in range(n_res_layers):          # full unroll: best LLO visibility
                carry = layer(0, carry)
        else:
            carry = jax.lax.fori_loop(0, n_res_layers, layer, carry, unroll=4)

        o_ref[0:half, :] = carry[0].astype(o_ref.dtype)
        o_ref[half:tile_rows, :] = carry[1].astype(o_ref.dtype)
    else:
        x = x_ref[...].astype(jnp.float32)

        def layer(_, xx):
            return res_block(xx)

        if n_res_layers <= 8:
            for _ in range(n_res_layers):
                x = layer(0, x)
        else:
            x = jax.lax.fori_loop(0, n_res_layers, layer, x, unroll=4)
        o_ref[...] = x.astype(o_ref.dtype)


def residual_stack(x, weight, bias, gamma, beta, n_res_layers,
                   *, tile_n=512, compute_dtype=None):
    """x: (..., D).  weight: (D, D) PyTorch-style (out, in).  Returns x.shape.

    compute_dtype: dtype of the matmul operands (defaults to x.dtype, so bf16
    inputs take the bf16 MXU path with f32 accumulation).
    """
    orig_shape = x.shape
    D = orig_shape[-1]
    x2 = x.reshape(-1, D)
    N = x2.shape[0]

    if compute_dtype is None:
        compute_dtype = x.dtype
    compute_dtype = jnp.dtype(compute_dtype)
    in_bytes = jnp.dtype(x.dtype).itemsize
    w_bytes = compute_dtype.itemsize

    # Lane-dense feature axis (multiple of 128).
    D_pad = _round_up(D, 128)

    # dtype-aware sublane packing: 8 rows per vreg group for 32-bit, 16 for
    # bf16/f16, 32 for 8-bit types.
    sub = {4: 8, 2: 16, 1: 32}.get(in_bytes, 8)

    # Row tile: multiple of the sublane pack, no larger than the padded slab.
    tile_n = max(sub, min(int(tile_n), _round_up(N, sub)))
    tile_n = _round_up(tile_n, sub)

    # Generation-aware VMEM budget (v5e/v6e 128 MiB, v7x 64 MiB).
    try:
        vmem_cap = pltpu.get_tpu_info().vmem_capacity_bytes
    except Exception:
        vmem_cap = 64 * 1024 * 1024               # conservative (v7x) fallback
    vmem_budget = int(0.8 * vmem_cap)

    # Constant-index weight/params only need one buffer; request it only when
    # the weight is big enough for the saving to matter.
    single_buffer_const = (D_pad * D_pad * w_bytes) > (2 << 20)
    w_buf = 1 if single_buffer_const else 2

    def _vmem_need(tn):
        act = 2 * 2 * tn * D_pad * in_bytes       # in + out row tiles, 2-deep
        wgt = w_buf * D_pad * D_pad * w_bytes     # resident W.T
        prm = w_buf * 3 * D_pad * 4               # packed [bias; gamma; beta]
        return act + wgt + prm

    # Shrink the row tile until the working set fits the physical budget.
    while _vmem_need(tile_n) > vmem_budget and tile_n > sub:
        tile_n = max(sub, _round_up(tile_n // 2, sub))
    # TODO(synk): when the resident (D_pad, D_pad) weight alone exceeds the
    # budget (bf16 D >= ~3072 / f32 D >= ~2048 on v7x's 64 MiB VMEM), tile the
    # contraction axis with pltpu.emit_pipeline instead of shrinking tile_n.

    n_pad = _round_up(N, tile_n)
    # Guarantee >= 2 parallel grid steps when tiles are large (v7x: 2 TCs/chip).
    if n_pad // tile_n == 1 and tile_n >= 256:
        tile_n = _round_up(tile_n // 2, sub)
        n_pad = _round_up(N, tile_n)

    # Intra-tile ILP split requires sublane-aligned halves.
    split = tile_n >= 2 * sub and tile_n % (2 * sub) == 0

    if (n_pad, D_pad) != (N, D):
        x2 = jnp.pad(x2, ((0, n_pad - N), (0, D_pad - D)))

    # One-time parameter prep (hoisted: cast/pad once, not per grid step).
    wt = jnp.pad(weight.T, ((0, D_pad - D), (0, D_pad - D))).astype(compute_dtype)
    params = jnp.stack([
        jnp.pad(bias.astype(jnp.float32), (0, D_pad - D)),
        jnp.pad(gamma.astype(jnp.float32), (0, D_pad - D)),
        jnp.pad(beta.astype(jnp.float32), (0, D_pad - D)),
    ], axis=0)                                    # (3, D_pad) f32

    need = _vmem_need(tile_n)
    vmem_limit = None
    if need > (16 << 20):     # smallest scoped default across generations (v5e)
        vmem_limit = min(int(need * 1.25), vmem_budget)

    const_kwargs = {}
    if single_buffer_const:
        const_kwargs = dict(pipeline_mode=pl.Buffered(1))

    kernel = functools.partial(_res_stack_kernel, n_res_layers=n_res_layers,
                               true_d=D, split=split)

    cost = pl.CostEstimate(
        flops=2 * n_pad * D_pad * D_pad * max(n_res_layers, 1),
        transcendentals=n_pad * max(n_res_layers, 1),     # rsqrt per row/layer
        bytes_accessed=(2 * n_pad * D_pad * in_bytes
                        + D_pad * D_pad * w_bytes + 3 * D_pad * 4),
    )

    out = pl.pallas_call(
        kernel,
        out_shape=jax.ShapeDtypeStruct((n_pad, D_pad), x.dtype),
        grid_spec=pltpu.PrefetchScalarGridSpec(
            num_scalar_prefetch=0,
            grid=(n_pad // tile_n,),
            in_specs=[
                pl.BlockSpec((tile_n, D_pad), lambda i: (i, 0)),      # x row-tile
                pl.BlockSpec((D_pad, D_pad), lambda i: (0, 0),        # W.T (resident)
                             **const_kwargs),
                pl.BlockSpec((3, D_pad), lambda i: (0, 0),            # params
                             **const_kwargs),
            ],
            out_specs=pl.BlockSpec((tile_n, D_pad), lambda i: (i, 0)),
        ),
        compiler_params=pltpu.CompilerParams(
            dimension_semantics=("parallel",),
            vmem_limit_bytes=vmem_limit),
        cost_estimate=cost,
    )(x2, wt, params)

    if (n_pad, D_pad) != (N, D):
        out = out[:N, :D]
    return out.reshape(orig_shape)


if __name__ == "__main__":
    # Small shapes consistent with the module: sequence of feature vectors.
    batch, seq, in_dim = 2, 8, 32
    n_res_layers = 3

    key = jax.random.PRNGKey(0)
    kx, kw, kb, kg, kbe = jax.random.split(key, 5)

    x = jax.random.normal(kx, (batch, seq, in_dim), dtype=jnp.float32)

    # Deterministic synthetic parameters (nn.Linear-ish init + LayerNorm affine).
    bound = 1.0 / (in_dim ** 0.5)
    weight = jax.random.uniform(kw, (in_dim, in_dim), jnp.float32, -bound, bound)
    bias = jax.random.uniform(kb, (in_dim,), jnp.float32, -bound, bound)
    gamma = jnp.ones((in_dim,), jnp.float32) + 0.01 * jax.random.normal(kg, (in_dim,))
    beta = 0.01 * jax.random.normal(kbe, (in_dim,), jnp.float32)

    out = residual_stack(x, weight, bias, gamma, beta, n_res_layers)
    jax.block_until_ready(out)

    # Pure-JAX reference of the same math (two-pass variance).
    def ref(xx):
        for _ in range(n_res_layers):
            h = xx @ weight.T + bias
            mu = jnp.mean(h, axis=-1, keepdims=True)
            var = jnp.mean((h - mu) ** 2, axis=-1, keepdims=True)
            hn = (h - mu) / jnp.sqrt(var + LN_EPS) * gamma + beta
            xx = xx + jnp.maximum(hn, 0.0)
        return xx

    ref_out = ref(x)
    assert out.shape == x.shape
    assert jnp.allclose(out, ref_out, atol=1e-4, rtol=1e-4), "mismatch vs reference"

    print("KERNEL_OK")
</pallas_src>

<mosaic_0001>
module attributes {stable_mosaic.version = 11 : i64} {
  func.func @_res_stack_kernel(%arg0: i32, %arg1: memref<16x128xf32, #tpu.memory_space<vmem>>, %arg2: memref<128x128xf32, #tpu.memory_space<vmem>>, %arg3: memref<3x128xf32, #tpu.memory_space<vmem>>, %arg4: memref<16x128xf32, #tpu.memory_space<vmem>>) attributes {dimension_semantics = [#tpu.dimension_semantics<parallel>], iteration_bounds = array<i64: 1>, scalar_prefetch = 0 : i64, scratch_operands = 0 : i64, tpu.core_type = #tpu.core_type<tc>, window_params = [{transform_indices = @transform_0, window_bounds = array<i64: 16, 128>}, {pipeline_mode = #tpu.pipeline_mode<synchronous>, transform_indices = @transform_1, window_bounds = array<i64: 128, 128>}, {pipeline_mode = #tpu.pipeline_mode<synchronous>, transform_indices = @transform_2, window_bounds = array<i64: 3, 128>}, {transform_indices = @transform_3, window_bounds = array<i64: 16, 128>}]} {
    %c0 = arith.constant 0 : index
    %c0_0 = arith.constant 0 : index
    %0 = vector.load %arg2[%c0, %c0_0] : memref<128x128xf32, #tpu.memory_space<vmem>>, vector<128x128xf32>
    %c0_1 = arith.constant 0 : index
    %c0_2 = arith.constant 0 : index
    %1 = vector.load %arg3[%c0_1, %c0_2] : memref<3x128xf32, #tpu.memory_space<vmem>>, vector<1x128xf32>
    %c1 = arith.constant 1 : index
    %c0_3 = arith.constant 0 : index
    %2 = vector.load %arg3[%c1, %c0_3] : memref<3x128xf32, #tpu.memory_space<vmem>>, vector<1x128xf32>
    %c2 = arith.constant 2 : index
    %c0_4 = arith.constant 0 : index
    %3 = vector.load %arg3[%c2, %c0_4] : memref<3x128xf32, #tpu.memory_space<vmem>>, vector<1x128xf32>
    %c0_5 = arith.constant 0 : index
    %c0_6 = arith.constant 0 : index
    %4 = vector.load %arg1[%c0_5, %c0_6] : memref<16x128xf32, #tpu.memory_space<vmem>>, vector<8x128xf32>
    %c8 = arith.constant 8 : index
    %c0_7 = arith.constant 0 : index
    %5 = vector.load %arg1[%c8, %c0_7] : memref<16x128xf32, #tpu.memory_space<vmem>>, vector<8x128xf32>
    %cst = arith.constant dense<0.000000e+00> : vector<8x128xf32>
    %6 = tpu.matmul %4, %0, %cst {dimension_numbers = #tpu.dot_dimension_numbers<[1], [0], [0], [1], [0, 0, 1, 1], [], []>} : vector<8x128xf32>, vector<128x128xf32>, vector<8x128xf32> -> vector<8x128xf32>
    %7 = vector.broadcast %1 : vector<1x128xf32> to vector<8x128xf32>
    %8 = arith.addf %6, %7 : vector<8x128xf32>
    %cst_8 = arith.constant dense<0.000000e+00> : vector<8xf32>
    %9 = vector.multi_reduction <add>, %8, %cst_8 [1] : vector<8x128xf32> to vector<8xf32>
    %10 = vector.shape_cast %9 : vector<8xf32> to vector<8x1xf32>
    %cst_9 = arith.constant 3.125000e-02 : f32
    %11 = vector.broadcast %cst_9 : f32 to vector<8x1xf32>
    %12 = arith.mulf %10, %11 : vector<8x1xf32>
    %13 = arith.mulf %8, %8 : vector<8x128xf32>
    %cst_10 = arith.constant dense<0.000000e+00> : vector<8xf32>
    %14 = vector.multi_reduction <add>, %13, %cst_10 [1] : vector<8x128xf32> to vector<8xf32>
    %15 = vector.shape_cast %14 : vector<8xf32> to vector<8x1xf32>
    %cst_11 = arith.constant 3.125000e-02 : f32
    %16 = vector.broadcast %cst_11 : f32 to vector<8x1xf32>
    %17 = arith.mulf %15, %16 : vector<8x1xf32>
    %18 = arith.mulf %12, %12 : vector<8x1xf32>
    %19 = arith.subf %17, %18 : vector<8x1xf32>
    %cst_12 = arith.constant 0.000000e+00 : f32
    %20 = vector.broadcast %cst_12 : f32 to vector<8x1xf32>
    %21 = arith.maximumf %19, %20 : vector<8x1xf32>
    %22 = vector.broadcast %12 : vector<8x1xf32> to vector<8x128xf32>
    %23 = arith.subf %8, %22 : vector<8x128xf32>
    %cst_13 = arith.constant 9.99999974E-6 : f32
    %24 = vector.broadcast %cst_13 : f32 to vector<8x1xf32>
    %25 = arith.addf %21, %24 : vector<8x1xf32>
    %26 = math.rsqrt %25 : vector<8x1xf32>
    %27 = vector.broadcast %26 : vector<8x1xf32> to vector<8x128xf32>
    %28 = arith.mulf %23, %27 : vector<8x128xf32>
    %29 = vector.broadcast %2 : vector<1x128xf32> to vector<8x128xf32>
    %30 = arith.mulf %28, %29 : vector<8x128xf32>
    %31 = vector.broadcast %3 : vector<1x128xf32> to vector<8x128xf32>
    %32 = arith.addf %30, %31 : vector<8x128xf32>
    %cst_14 = arith.constant 0.000000e+00 : f32
    %33 = vector.broadcast %cst_14 : f32 to vector<8x128xf32>
    %34 = arith.maximumf %32, %33 : vector<8x128xf32>
    %35 = arith.addf %4, %34 : vector<8x128xf32>
    %cst_15 = arith.constant dense<0.000000e+00> : vector<8x128xf32>
    %36 = tpu.matmul %5, %0, %cst_15 {dimension_numbers = #tpu.dot_dimension_numbers<[1], [0], [0], [1], [0, 0, 1, 1], [], []>} : vector<8x128xf32>, vector<128x128xf32>, vector<8x128xf32> -> vector<8x128xf32>
    %37 = vector.broadcast %1 : vector<1x128xf32> to vector<8x128xf32>
    %38 = arith.addf %36, %37 : vector<8x128xf32>
    %cst_16 = arith.constant dense<0.000000e+00> : vector<8xf32>
    %39 = vector.multi_reduction <add>, %38, %cst_16 [1] : vector<8x128xf32> to vector<8xf32>
    %40 = vector.shape_cast %39 : vector<8xf32> to vector<8x1xf32>
    %cst_17 = arith.constant 3.125000e-02 : f32
    %41 = vector.broadcast %cst_17 : f32 to vector<8x1xf32>
    %42 = arith.mulf %40, %41 : vector<8x1xf32>
    %43 = arith.mulf %38, %38 : vector<8x128xf32>
    %cst_18 = arith.constant dense<0.000000e+00> : vector<8xf32>
    %44 = vector.multi_reduction <add>, %43, %cst_18 [1] : vector<8x128xf32> to vector<8xf32>
    %45 = vector.shape_cast %44 : vector<8xf32> to vector<8x1xf32>
    %cst_19 = arith.constant 3.125000e-02 : f32
    %46 = vector.broadcast %cst_19 : f32 to vector<8x1xf32>
    %47 = arith.mulf %45, %46 : vector<8x1xf32>
    %48 = arith.mulf %42, %42 : vector<8x1xf32>
    %49 = arith.subf %47, %48 : vector<8x1xf32>
    %cst_20 = arith.constant 0.000000e+00 : f32
    %50 = vector.broadcast %cst_20 : f32 to vector<8x1xf32>
    %51 = arith.maximumf %49, %50 : vector<8x1xf32>
    %52 = vector.broadcast %42 : vector<8x1xf32> to vector<8x128xf32>
    %53 = arith.subf %38, %52 : vector<8x128xf32>
    %cst_21 = arith.constant 9.99999974E-6 : f32
    %54 = vector.broadcast %cst_21 : f32 to vector<8x1xf32>
    %55 = arith.addf %51, %54 : vector<8x1xf32>
    %56 = math.rsqrt %55 : vector<8x1xf32>
    %57 = vector.broadcast %56 : vector<8x1xf32> to vector<8x128xf32>
    %58 = arith.mulf %53, %57 : vector<8x128xf32>
    %59 = vector.broadcast %2 : vector<1x128xf32> to vector<8x128xf32>
    %60 = arith.mulf %58, %59 : vector<8x128xf32>
    %61 = vector.broadcast %3 : vector<1x128xf32> to vector<8x128xf32>
    %62 = arith.addf %60, %61 : vector<8x128xf32>
    %cst_22 = arith.constant 0.000000e+00 : f32
    %63 = vector.broadcast %cst_22 : f32 to vector<8x128xf32>
    %64 = arith.maximumf %62, %63 : vector<8x128xf32>
    %65 = arith.addf %5, %64 : vector<8x128xf32>
    %cst_23 = arith.constant dense<0.000000e+00> : vector<8x128xf32>
    %66 = tpu.matmul %35, %0, %cst_23 {dimension_numbers = #tpu.dot_dimension_numbers<[1], [0], [0], [1], [0, 0, 1, 1], [], []>} : vector<8x128xf32>, vector<128x128xf32>, vector<8x128xf32> -> vector<8x128xf32>
    %67 = vector.broadcast %1 : vector<1x128xf32> to vector<8x128xf32>
    %68 = arith.addf %66, %67 : vector<8x128xf32>
    %cst_24 = arith.constant dense<0.000000e+00> : vector<8xf32>
    %69 = vector.multi_reduction <add>, %68, %cst_24 [1] : vector<8x128xf32> to vector<8xf32>
    %70 = vector.shape_cast %69 : vector<8xf32> to vector<8x1xf32>
    %cst_25 = arith.constant 3.125000e-02 : f32
    %71 = vector.broadcast %cst_25 : f32 to vector<8x1xf32>
    %72 = arith.mulf %70, %71 : vector<8x1xf32>
    %73 = arith.mulf %68, %68 : vector<8x128xf32>
    %cst_26 = arith.constant dense<0.000000e+00> : vector<8xf32>
    %74 = vector.multi_reduction <add>, %73, %cst_26 [1] : vector<8x128xf32> to vector<8xf32>
    %75 = vector.shape_cast %74 : vector<8xf32> to vector<8x1xf32>
    %cst_27 = arith.constant 3.125000e-02 : f32
    %76 = vector.broadcast %cst_27 : f32 to vector<8x1xf32>
    %77 = arith.mulf %75, %76 : vector<8x1xf32>
    %78 = arith.mulf %72, %72 : vector<8x1xf32>
    %79 = arith.subf %77, %78 : vector<8x1xf32>
    %cst_28 = arith.constant 0.000000e+00 : f32
    %80 = vector.broadcast %cst_28 : f32 to vector<8x1xf32>
    %81 = arith.maximumf %79, %80 : vector<8x1xf32>
    %82 = vector.broadcast %72 : vector<8x1xf32> to vector<8x128xf32>
    %83 = arith.subf %68, %82 : vector<8x128xf32>
    %cst_29 = arith.constant 9.99999974E-6 : f32
    %84 = vector.broadcast %cst_29 : f32 to vector<8x1xf32>
    %85 = arith.addf %81, %84 : vector<8x1xf32>
    %86 = math.rsqrt %85 : vector<8x1xf32>
    %87 = vector.broadcast %86 : vector<8x1xf32> to vector<8x128xf32>
    %88 = arith.mulf %83, %87 : vector<8x128xf32>
    %89 = vector.broadcast %2 : vector<1x128xf32> to vector<8x128xf32>
    %90 = arith.mulf %88, %89 : vector<8x128xf32>
    %91 = vector.broadcast %3 : vector<1x128xf32> to vector<8x128xf32>
    %92 = arith.addf %90, %91 : vector<8x128xf32>
    %cst_30 = arith.constant 0.000000e+00 : f32
    %93 = vector.broadcast %cst_30 : f32 to vector<8x128xf32>
    %94 = arith.maximumf %92, %93 : vector<8x128xf32>
    %95 = arith.addf %35, %94 : vector<8x128xf32>
    %cst_31 = arith.constant dense<0.000000e+00> : vector<8x128xf32>
    %96 = tpu.matmul %65, %0, %cst_31 {dimension_numbers = #tpu.dot_dimension_numbers<[1], [0], [0], [1], [0, 0, 1, 1], [], []>} : vector<8x128xf32>, vector<128x128xf32>, vector<8x128xf32> -> vector<8x128xf32>
    %97 = vector.broadcast %1 : vector<1x128xf32> to vector<8x128xf32>
    %98 = arith.addf %96, %97 : vector<8x128xf32>
    %cst_32 = arith.constant dense<0.000000e+00> : vector<8xf32>
    %99 = vector.multi_reduction <add>, %98, %cst_32 [1] : vector<8x128xf32> to vector<8xf32>
    %100 = vector.shape_cast %99 : vector<8xf32> to vector<8x1xf32>
    %cst_33 = arith.constant 3.125000e-02 : f32
    %101 = vector.broadcast %cst_33 : f32 to vector<8x1xf32>
    %102 = arith.mulf %100, %101 : vector<8x1xf32>
    %103 = arith.mulf %98, %98 : vector<8x128xf32>
    %cst_34 = arith.constant dense<0.000000e+00> : vector<8xf32>
    %104 = vector.multi_reduction <add>, %103, %cst_34 [1] : vector<8x128xf32> to vector<8xf32>
    %105 = vector.shape_cast %104 : vector<8xf32> to vector<8x1xf32>
    %cst_35 = arith.constant 3.125000e-02 : f32
    %106 = vector.broadcast %cst_35 : f32 to vector<8x1xf32>
    %107 = arith.mulf %105, %106 : vector<8x1xf32>
    %108 = arith.mulf %102, %102 : vector<8x1xf32>
    %109 = arith.subf %107, %108 : vector<8x1xf32>
    %cst_36 = arith.constant 0.000000e+00 : f32
    %110 = vector.broadcast %cst_36 : f32 to vector<8x1xf32>
    %111 = arith.maximumf %109, %110 : vector<8x1xf32>
    %112 = vector.broadcast %102 : vector<8x1xf32> to vector<8x128xf32>
    %113 = arith.subf %98, %112 : vector<8x128xf32>
    %cst_37 = arith.constant 9.99999974E-6 : f32
    %114 = vector.broadcast %cst_37 : f32 to vector<8x1xf32>
    %115 = arith.addf %111, %114 : vector<8x1xf32>
    %116 = math.rsqrt %115 : vector<8x1xf32>
    %117 = vector.broadcast %116 : vector<8x1xf32> to vector<8x128xf32>
    %118 = arith.mulf %113, %117 : vector<8x128xf32>
    %119 = vector.broadcast %2 : vector<1x128xf32> to vector<8x128xf32>
    %120 = arith.mulf %118, %119 : vector<8x128xf32>
    %121 = vector.broadcast %3 : vector<1x128xf32> to vector<8x128xf32>
    %122 = arith.addf %120, %121 : vector<8x128xf32>
    %cst_38 = arith.constant 0.000000e+00 : f32
    %123 = vector.broadcast %cst_38 : f32 to vector<8x128xf32>
    %124 = arith.maximumf %122, %123 : vector<8x128xf32>
    %125 = arith.addf %65, %124 : vector<8x128xf32>
    %cst_39 = arith.constant dense<0.000000e+00> : vector<8x128xf32>
    %126 = tpu.matmul %95, %0, %cst_39 {dimension_numbers = #tpu.dot_dimension_numbers<[1], [0], [0], [1], [0, 0, 1, 1], [], []>} : vector<8x128xf32>, vector<128x128xf32>, vector<8x128xf32> -> vector<8x128xf32>
    %127 = vector.broadcast %1 : vector<1x128xf32> to vector<8x128xf32>
    %128 = arith.addf %126, %127 : vector<8x128xf32>
    %cst_40 = arith.constant dense<0.000000e+00> : vector<8xf32>
    %129 = vector.multi_reduction <add>, %128, %cst_40 [1] : vector<8x128xf32> to vector<8xf32>
    %130 = vector.shape_cast %129 : vector<8xf32> to vector<8x1xf32>
    %cst_41 = arith.constant 3.125000e-02 : f32
    %131 = vector.broadcast %cst_41 : f32 to vector<8x1xf32>
    %132 = arith.mulf %130, %131 : vector<8x1xf32>
    %133 = arith.mulf %128, %128 : vector<8x128xf32>
    %cst_42 = arith.constant dense<0.000000e+00> : vector<8xf32>
    %134 = vector.multi_reduction <add>, %133, %cst_42 [1] : vector<8x128xf32> to vector<8xf32>
    %135 = vector.shape_cast %134 : vector<8xf32> to vector<8x1xf32>
    %cst_43 = arith.constant 3.125000e-02 : f32
    %136 = vector.broadcast %cst_43 : f32 to vector<8x1xf32>
    %137 = arith.mulf %135, %136 : vector<8x1xf32>
    %138 = arith.mulf %132, %132 : vector<8x1xf32>
    %139 = arith.subf %137, %138 : vector<8x1xf32>
    %cst_44 = arith.constant 0.000000e+00 : f32
    %140 = vector.broadcast %cst_44 : f32 to vector<8x1xf32>
    %141 = arith.maximumf %139, %140 : vector<8x1xf32>
    %142 = vector.broadcast %132 : vector<8x1xf32> to vector<8x128xf32>
    %143 = arith.subf %128, %142 : vector<8x128xf32>
    %cst_45 = arith.constant 9.99999974E-6 : f32
    %144 = vector.broadcast %cst_45 : f32 to vector<8x1xf32>
    %145 = arith.addf %141, %144 : vector<8x1xf32>
    %146 = math.rsqrt %145 : vector<8x1xf32>
    %147 = vector.broadcast %146 : vector<8x1xf32> to vector<8x128xf32>
    %148 = arith.mulf %143, %147 : vector<8x128xf32>
    %149 = vector.broadcast %2 : vector<1x128xf32> to vector<8x128xf32>
    %150 = arith.mulf %148, %149 : vector<8x128xf32>
    %151 = vector.broadcast %3 : vector<1x128xf32> to vector<8x128xf32>
    %152 = arith.addf %150, %151 : vector<8x128xf32>
    %cst_46 = arith.constant 0.000000e+00 : f32
    %153 = vector.broadcast %cst_46 : f32 to vector<8x128xf32>
    %154 = arith.maximumf %152, %153 : vector<8x128xf32>
    %155 = arith.addf %95, %154 : vector<8x128xf32>
    %cst_47 = arith.constant dense<0.000000e+00> : vector<8x128xf32>
    %156 = tpu.matmul %125, %0, %cst_47 {dimension_numbers = #tpu.dot_dimension_numbers<[1], [0], [0], [1], [0, 0, 1, 1], [], []>} : vector<8x128xf32>, vector<128x128xf32>, vector<8x128xf32> -> vector<8x128xf32>
    %157 = vector.broadcast %1 : vector<1x128xf32> to vector<8x128xf32>
    %158 = arith.addf %156, %157 : vector<8x128xf32>
    %cst_48 = arith.constant dense<0.000000e+00> : vector<8xf32>
    %159 = vector.multi_reduction <add>, %158, %cst_48 [1] : vector<8x128xf32> to vector<8xf32>
    %160 = vector.shape_cast %159 : vector<8xf32> to vector<8x1xf32>
    %cst_49 = arith.constant 3.125000e-02 : f32
    %161 = vector.broadcast %cst_49 : f32 to vector<8x1xf32>
    %162 = arith.mulf %160, %161 : vector<8x1xf32>
    %163 = arith.mulf %158, %158 : vector<8x128xf32>
    %cst_50 = arith.constant dense<0.000000e+00> : vector<8xf32>
    %164 = vector.multi_reduction <add>, %163, %cst_50 [1] : vector<8x128xf32> to vector<8xf32>
    %165 = vector.shape_cast %164 : vector<8xf32> to vector<8x1xf32>
    %cst_51 = arith.constant 3.125000e-02 : f32
    %166 = vector.broadcast %cst_51 : f32 to vector<8x1xf32>
    %167 = arith.mulf %165, %166 : vector<8x1xf32>
    %168 = arith.mulf %162, %162 : vector<8x1xf32>
    %169 = arith.subf %167, %168 : vector<8x1xf32>
    %cst_52 = arith.constant 0.000000e+00 : f32
    %170 = vector.broadcast %cst_52 : f32 to vector<8x1xf32>
    %171 = arith.maximumf %169, %170 : vector<8x1xf32>
    %172 = vector.broadcast %162 : vector<8x1xf32> to vector<8x128xf32>
    %173 = arith.subf %158, %172 : vector<8x128xf32>
    %cst_53 = arith.constant 9.99999974E-6 : f32
    %174 = vector.broadcast %cst_53 : f32 to vector<8x1xf32>
    %175 = arith.addf %171, %174 : vector<8x1xf32>
    %176 = math.rsqrt %175 : vector<8x1xf32>
    %177 = vector.broadcast %176 : vector<8x1xf32> to vector<8x128xf32>
    %178 = arith.mulf %173, %177 : vector<8x128xf32>
    %179 = vector.broadcast %2 : vector<1x128xf32> to vector<8x128xf32>
    %180 = arith.mulf %178, %179 : vector<8x128xf32>
    %181 = vector.broadcast %3 : vector<1x128xf32> to vector<8x128xf32>
    %182 = arith.addf %180, %181 : vector<8x128xf32>
    %cst_54 = arith.constant 0.000000e+00 : f32
    %183 = vector.broadcast %cst_54 : f32 to vector<8x128xf32>
    %184 = arith.maximumf %182, %183 : vector<8x128xf32>
    %185 = arith.addf %125, %184 : vector<8x128xf32>
    %c0_55 = arith.constant 0 : index
    %c0_56 = arith.constant 0 : index
    %186 = vector.load %arg4[%c0_55, %c0_56] : memref<16x128xf32, #tpu.memory_space<vmem>>, vector<8x128xf32>
    tpu.vector_store %arg4[%c0_55, %c0_56], %155 {strides = array<i32>} : memref<16x128xf32, #tpu.memory_space<vmem>>, vector<8x128xf32>,
    %c8_57 = arith.constant 8 : index
    %c0_58 = arith.constant 0 : index
    %187 = vector.load %arg4[%c8_57, %c0_58] : memref<16x128xf32, #tpu.memory_space<vmem>>, vector<8x128xf32>
    tpu.vector_store %arg4[%c8_57, %c0_58], %185 {strides = array<i32>} : memref<16x128xf32, #tpu.memory_space<vmem>>, vector<8x128xf32>,
    return
  }
  func.func @transform_0(%arg0: i32) -> (i32, i32) {
    %c0_i32 = arith.constant 0 : i32
    %c0_i32_0 = arith.constant 0 : i32
    return %arg0, %c0_i32 : i32, i32
  }
  func.func @transform_1(%arg0: i32) -> (i32, i32) {
    %c0_i32 = arith.constant 0 : i32
    %c0_i32_0 = arith.constant 0 : i32
    %c0_i32_1 = arith.constant 0 : i32
    return %c0_i32, %c0_i32_0 : i32, i32
  }
  func.func @transform_2(%arg0: i32) -> (i32, i32) {
    %c0_i32 = arith.constant 0 : i32
    %c0_i32_0 = arith.constant 0 : i32
    %c0_i32_1 = arith.constant 0 : i32
    return %c0_i32, %c0_i32_0 : i32, i32
  }
  func.func @transform_3(%arg0: i32) -> (i32, i32) {
    %c0_i32 = arith.constant 0 : i32
    %c0_i32_0 = arith.constant 0 : i32
    return %arg0, %c0_i32 : i32, i32
  }
}

</mosaic_0001>

<llo_original>
// kernel: tpu_custom_call.1
$region0: #{tpu_custom_call.1}
  #allocation0 [shape = 'u32[]', space=smem, size = 0x4, offset = 0x4, fixed_abs, tag = 'smem constant byte address 0x4 - core index']
  #allocation1 [shape = 'u32[144,128]{1,0:T(1,128)}', space=vmem, size = 0x12000, scoped, tag = 'internal scratch']
  %s0 = inlined_call_operand.hbm [shape: f32[16,128], index: 0, kind: input, shape index: {}]
  %s1 = inlined_call_operand.hbm [shape: f32[128,128], index: 1, kind: input, shape index: {}]
  %s2 = inlined_call_operand.vmem [shape: f32[3,128], index: 2, kind: input, shape index: {}]
  %s3 = inlined_call_operand.hbm [shape: f32[16,128], index: 3, kind: output, shape index: {}]
  %s4 = sld [smem:[#allocation0]]
  $region30: #{tpu_custom_call.1} parent=0
    _
  %s6 = ssub.s32 1, %s4
  %s7 = scalar_select 0, %s6, %s4
  $region1: #{tpu_custom_call.1} parent=0
    #allocation2 [shape = 'u8[8192]{0}', space=vmem, size = 0x2000, scoped, tag = 'input window, operand 0, single buffered']
    #allocation3 [shape = 's32[1]{0}', space=sflag, size = 0x4, scoped, tag = 'scoped memory for tpu_custom_call.1']
    #allocation4 [shape = 's32[1]{0}', space=sflag, size = 0x4, scoped, tag = 'scoped memory for tpu_custom_call.1']
    #allocation5 [shape = 'u8[65536]{0}', space=vmem, size = 0x10000, scoped, tag = 'input window, operand 1, single buffered']
    #allocation6 [shape = 's32[1]{0}', space=sflag, size = 0x4, scoped, tag = 'scoped memory for tpu_custom_call.1']
    #allocation7 [shape = 'u8[8192]{0}', space=vmem, size = 0x2000, scoped, tag = 'output window, operand 0, single buffered']
    %8 = vsyncpa [#allocation3], 0
    %9 = vsyncpa [#allocation6], 0
    %10 = vsyncpa [#allocation4], 0
    // Predicated region
    $region2: #{tpu_custom_call.1} parent=1 // pred_check
      _
    $region3: #{tpu_custom_call.1} parent=1 // pred_check_branch
      %12 = sbr.rel (0) target = $region5
    $region4: #{tpu_custom_call.1} parent=1 // pred_region
      %s14 = ssub.s32 256, 256
      %15 = vsyncadd [#allocation3], %s14
      %s16 = sshll.u32 [#allocation2], 4
      %s17 = int_to_ptr.vmem [resolvable:$true] %s16
      %22 = dma.hbm_to_vmem [thread:$0]  %s0, 256, %s17, [#allocation3], 128, 128, 8
    $region5: #{tpu_custom_call.1} parent=1 // pred_fallthru
      _
    // Predicated region
    $region6: #{tpu_custom_call.1} parent=1 // pred_check
      _
    $region7: #{tpu_custom_call.1} parent=1 // pred_check_branch
      %24 = sbr.rel (0) target = $region9
    $region8: #{tpu_custom_call.1} parent=1 // pred_region
      %s26 = ssub.s32 2048, 2048
      %27 = vsyncadd [#allocation6], %s26
      %s28 = sshll.u32 [#allocation5], 4
      %s29 = int_to_ptr.vmem [resolvable:$true] %s28
      %34 = dma.hbm_to_vmem [thread:$0]  %s1, 2048, %s29, [#allocation6], 128, 128, 8
    $region9: #{tpu_custom_call.1} parent=1 // pred_fallthru
      _
    // Predicated region
    $region10: #{tpu_custom_call.1} parent=1 // pred_check
      _
    $region11: #{tpu_custom_call.1} parent=1 // pred_check_branch
      %36 = sbr.rel (0) target = $region13
    $region12: #{tpu_custom_call.1} parent=1 // pred_region
      _
    $region13: #{tpu_custom_call.1} parent=1 // pred_fallthru
      _
    // Predicated region
    $region14: #{tpu_custom_call.1} parent=1 // pred_check
      _
    $region15: #{tpu_custom_call.1} parent=1 // pred_check_branch
      %38 = sbr.rel (0) target = $region17
    $region16: #{tpu_custom_call.1} parent=1 // pred_region
      %39 = dma.done [#allocation3], 256
    $region17: #{tpu_custom_call.1} parent=1 // pred_fallthru
      _
    // Predicated region
    $region18: #{tpu_custom_call.1} parent=1 // pred_check
      _
    $region19: #{tpu_custom_call.1} parent=1 // pred_check_branch
      %41 = sbr.rel (0) target = $region21
    $region20: #{tpu_custom_call.1} parent=1 // pred_region
      %42 = dma.done [#allocation6], 2048
    $region21: #{tpu_custom_call.1} parent=1 // pred_fallthru
      _
    %v43 = vld [vmem:[#allocation5] sm:$0xff]
    %v44 = vld [vmem:[#allocation5 + $0x8] sm:$0xff]
    %v45 = vld [vmem:[#allocation5 + $0x10] sm:$0xff]
    %v46 = vld [vmem:[#allocation5 + $0x18] sm:$0xff]
    %v47 = vld [vmem:[#allocation5 + $0x20] sm:$0xff]
    %v48 = vld [vmem:[#allocation5 + $0x28] sm:$0xff]
    %v49 = vld [vmem:[#allocation5 + $0x30] sm:$0xff]
    %v50 = vld [vmem:[#allocation5 + $0x38] sm:$0xff]
    %v51 = vld [vmem:[#allocation5 + $0x40] sm:$0xff]
    %v52 = vld [vmem:[#allocation5 + $0x48] sm:$0xff]
    %v53 = vld [vmem:[#allocation5 + $0x50] sm:$0xff]
    %v54 = vld [vmem:[#allocation5 + $0x58] sm:$0xff]
    %v55 = vld [vmem:[#allocation5 + $0x60] sm:$0xff]
    %v56 = vld [vmem:[#allocation5 + $0x68] sm:$0xff]
    %v57 = vld [vmem:[#allocation5 + $0x70] sm:$0xff]
    %v58 = vld [vmem:[#allocation5 + $0x78] sm:$0xff]
    %v59 = vld [vmem:[%s2] sm:$0x1]
    %v60 = vld [vmem:[%s2 + $0x1] sm:$0x1]
    %v61 = vld [vmem:[%s2 + $0x2] sm:$0x1]
    %v62 = vld [vmem:[#allocation2] sm:$0xff]
    %v63 = vld [vmem:[#allocation2 + $0x8] sm:$0xff]
    %v64 = vlaneseq
    %v65 = vshrl.u32 %v64, 7
    %v66 = vsub.s32 0, %v65
    %v67 = vrot.slane %v59, %v66
    %68 = vmatprep.subr.mxu0 0.0
    %69 = vmatpush1.msra.mxu0 %v43
    %70 = vmatprep.subr.mxu0 0.0
    %71 = vmatpush1.msra.mxu0 %v44
    %72 = vmatprep.subr.mxu0 0.0
    %73 = vmatpush1.msra.mxu0 %v45
    %74 = vmatprep.subr.mxu0 0.0
    %75 = vmatpush1.msra.mxu0 %v46
    %76 = vmatprep.subr.mxu0 0.0
    %77 = vmatpush1.msra.mxu0 %v47
    %78 = vmatprep.subr.mxu0 0.0
    %79 = vmatpush1.msra.mxu0 %v48
    %80 = vmatprep.subr.mxu0 0.0
    %81 = vmatpush1.msra.mxu0 %v49
    %82 = vmatprep.subr.mxu0 0.0
    %83 = vmatpush1.msra.mxu0 %v50
    %84 = vmatprep.subr.mxu0 0.0
    %85 = vmatpush1.msra.mxu0 %v51
    %86 = vmatprep.subr.mxu0 0.0
    %87 = vmatpush1.msra.mxu0 %v52
    %88 = vmatprep.subr.mxu0 0.0
    %89 = vmatpush1.msra.mxu0 %v53
    %90 = vmatprep.subr.mxu0 0.0
    %91 = vmatpush1.msra.mxu0 %v54
    %92 = vmatprep.subr.mxu0 0.0
    %93 = vmatpush1.msra.mxu0 %v55
    %94 = vmatprep.subr.mxu0 0.0
    %95 = vmatpush1.msra.mxu0 %v56
    %96 = vmatprep.subr.mxu0 0.0
    %97 = vmatpush1.msra.mxu0 %v57
    %98 = vmatprep.subr.mxu0 0.0
    %99 = vmatpush1.msra.mxu0 %v58
    %100 = vmatprep.subr.mxu0 0.0
    %101 = vmatpush1.msra.mxu0 0.0
    %102 = vmatprep.subr.mxu0 0.0
    %103 = vmatpush1.msra.mxu0 0.0
    %104 = vmatprep.subr.mxu0 0.0
    %105 = vmatpush1.msra.mxu0 0.0
    %106 = vmatprep.subr.mxu0 0.0
    %107 = vmatpush1.msra.mxu0 0.0
    %108 = vmatprep.subr.mxu0 0.0
    %109 = vmatpush1.msra.mxu0 0.0
    %110 = vmatprep.subr.mxu0 0.0
    %111 = vmatpush1.msra.mxu0 0.0
    %112 = vmatprep.subr.mxu0 0.0
    %113 = vmatpush1.msra.mxu0 0.0
    %114 = vmatprep.subr.mxu0 0.0
    %115 = vmatpush1.msra.mxu0 0.0
    %116 = vmatprep.subr.mxu0 0.0
    %117 = vmatpush1.msra.mxu0 0.0
    %118 = vmatprep.subr.mxu0 0.0
    %119 = vmatpush1.msra.mxu0 0.0
    %120 = vmatprep.subr.mxu0 0.0
    %121 = vmatpush1.msra.mxu0 0.0
    %122 = vmatprep.subr.mxu0 0.0
    %123 = vmatpush1.msra.mxu0 0.0
    %124 = vmatprep.subr.mxu0 0.0
    %125 = vmatpush1.msra.mxu0 0.0
    %126 = vmatprep.subr.mxu0 0.0
    %127 = vmatpush1.msra.mxu0 0.0
    %128 = vmatprep.subr.mxu0 0.0
    %129 = vmatpush1.msra.mxu0 0.0
    %130 = vmatprep.subr.mxu0 0.0
    %131 = vmatpush1.msra.mxu0 0.0
    %132 = vmatprep.mubr.f32.mxu0 0.0
    %133 = vmatmul.mubr.f32.gmra.mrb[0].mxu0 %v62
    %v134 = vpop.f32.mrb[0].mxu0
    %v135 = vadd.f32 %v67, %v134
    %v136 = vpop.f32.mrb[0].mxu0
    %137 = vdwg.mxu0
    %138 = vadd.xlane.f32.xlu0 %v135
    %v139 = vpop.xlane.xlu0 %138
    %v140 = vmul.f32 %v139, 0.03125
    %v141 = vmul.f32 %v135, %v135
    %142 = vadd.xlane.f32.xlu0 %v141
    %v143 = vpop.xlane.xlu0 %142
    %v144 = vmul.f32 %v143, 0.03125
    %v145 = vmul.f32 %v140, %v140
    %v146 = vsub.f32 %v144, %v145
    %v147 = vmax.f32 %v146, 0.0
    %v148 = vsub.f32 %v135, %v140
    %v149 = vadd.f32 %v147, 1e-05
    %v150 = vrsqrt.pop %v149
    %v151 = vmul.f32 %v148, %v150
    %v152 = vlaneseq
    %v153 = vshrl.u32 %v152, 7
    %v154 = vsub.s32 0, %v153
    %v155 = vrot.slane %v60, %v154
    %v156 = vmul.f32 %v151, %v155
    %v157 = vlaneseq
    %v158 = vshrl.u32 %v157, 7
    %v159 = vsub.s32 0, %v158
    %v160 = vrot.slane %v61, %v159
    %v161 = vadd.f32 %v156, %v160
    %v162 = vmax.f32 %v161, 0.0
    %v163 = vadd.f32 %v62, %v162
    %164 = vmatprep.subr.mxu0 0.0
    %165 = vmatpush1.msra.mxu0 %v43
    %166 = vmatprep.subr.mxu0 0.0
    %167 = vmatpush1.msra.mxu0 %v44
    %168 = vmatprep.subr.mxu0 0.0
    %169 = vmatpush1.msra.mxu0 %v45
    %170 = vmatprep.subr.mxu0 0.0
    %171 = vmatpush1.msra.mxu0 %v46
    %172 = vmatprep.subr.mxu0 0.0
    %173 = vmatpush1.msra.mxu0 %v47
    %174 = vmatprep.subr.mxu0 0.0
    %175 = vmatpush1.msra.mxu0 %v48
    %176 = vmatprep.subr.mxu0 0.0
    %177 = vmatpush1.msra.mxu0 %v49
    %178 = vmatprep.subr.mxu0 0.0
    %179 = vmatpush1.msra.mxu0 %v50
    %180 = vmatprep.subr.mxu0 0.0
    %181 = vmatpush1.msra.mxu0 %v51
    %182 = vmatprep.subr.mxu0 0.0
    %183 = vmatpush1.msra.mxu0 %v52
    %184 = vmatprep.subr.mxu0 0.0
    %185 = vmatpush1.msra.mxu0 %v53
    %186 = vmatprep.subr.mxu0 0.0
    %187 = vmatpush1.msra.mxu0 %v54
    %188 = vmatprep.subr.mxu0 0.0
    %189 = vmatpush1.msra.mxu0 %v55
    %190 = vmatprep.subr.mxu0 0.0
    %191 = vmatpush1.msra.mxu0 %v56
    %192 = vmatprep.subr.mxu0 0.0
    %193 = vmatpush1.msra.mxu0 %v57
    %194 = vmatprep.subr.mxu0 0.0
    %195 = vmatpush1.msra.mxu0 %v58
    %196 = vmatprep.subr.mxu0 0.0
    %197 = vmatpush1.msra.mxu0 0.0
    %198 = vmatprep.subr.mxu0 0.0
    %199 = vmatpush1.msra.mxu0 0.0
    %200 = vmatprep.subr.mxu0 0.0
    %201 = vmatpush1.msra.mxu0 0.0
    %202 = vmatprep.subr.mxu0 0.0
    %203 = vmatpush1.msra.mxu0 0.0
    %204 = vmatprep.subr.mxu0 0.0
    %205 = vmatpush1.msra.mxu0 0.0
    %206 = vmatprep.subr.mxu0 0.0
    %207 = vmatpush1.msra.mxu0 0.0
    %208 = vmatprep.subr.mxu0 0.0
    %209 = vmatpush1.msra.mxu0 0.0
    %210 = vmatprep.subr.mxu0 0.0
    %211 = vmatpush1.msra.mxu0 0.0
    %212 = vmatprep.subr.mxu0 0.0
    %213 = vmatpush1.msra.mxu0 0.0
    %214 = vmatprep.subr.mxu0 0.0
    %215 = vmatpush1.msra.mxu0 0.0
    %216 = vmatprep.subr.mxu0 0.0
    %217 = vmatpush1.msra.mxu0 0.0
    %218 = vmatprep.subr.mxu0 0.0
    %219 = vmatpush1.msra.mxu0 0.0
    %220 = vmatprep.subr.mxu0 0.0
    %221 = vmatpush1.msra.mxu0 0.0
    %222 = vmatprep.subr.mxu0 0.0
    %223 = vmatpush1.msra.mxu0 0.0
    %224 = vmatprep.subr.mxu0 0.0
    %225 = vmatpush1.msra.mxu0 0.0
    %226 = vmatprep.subr.mxu0 0.0
    %227 = vmatpush1.msra.mxu0 0.0
    %228 = vmatprep.mubr.f32.mxu0 0.0
    %229 = vmatmul.mubr.f32.gmra.mrb[0].mxu0 %v63
    %v230 = vpop.f32.mrb[0].mxu0
    %v231 = vadd.f32 %v67, %v230
    %v232 = vpop.f32.mrb[0].mxu0
    %233 = vdwg.mxu0
    %234 = vadd.xlane.f32.xlu0 %v231
    %v235 = vpop.xlane.xlu0 %234
    %v236 = vmul.f32 %v235, 0.03125
    %v237 = vmul.f32 %v231, %v231
    %238 = vadd.xlane.f32.xlu0 %v237
    %v239 = vpop.xlane.xlu0 %238
    %v240 = vmul.f32 %v239, 0.03125
    %v241 = vmul.f32 %v236, %v236
    %v242 = vsub.f32 %v240, %v241
    %v243 = vmax.f32 %v242, 0.0
    %v244 = vsub.f32 %v231, %v236
    %v245 = vadd.f32 %v243, 1e-05
    %v246 = vrsqrt.pop %v245
    %v247 = vmul.f32 %v244, %v246
    %v248 = vmul.f32 %v247, %v155
    %v249 = vadd.f32 %v248, %v160
    %v250 = vmax.f32 %v249, 0.0
    %v251 = vadd.f32 %v63, %v250
    %252 = vmatprep.subr.mxu0 0.0
    %253 = vmatpush1.msra.mxu0 %v43
    %254 = vmatprep.subr.mxu0 0.0
    %255 = vmatpush1.msra.mxu0 %v44
    %256 = vmatprep.subr.mxu0 0.0
    %257 = vmatpush1.msra.mxu0 %v45
    %258 = vmatprep.subr.mxu0 0.0
    %259 = vmatpush1.msra.mxu0 %v46
    %260 = vmatprep.subr.mxu0 0.0
    %261 = vmatpush1.msra.mxu0 %v47
    %262 = vmatprep.subr.mxu0 0.0
    %263 = vmatpush1.msra.mxu0 %v48
    %264 = vmatprep.subr.mxu0 0.0
    %265 = vmatpush1.msra.mxu0 %v49
    %266 = vmatprep.subr.mxu0 0.0
    %267 = vmatpush1.msra.mxu0 %v50
    %268 = vmatprep.subr.mxu0 0.0
    %269 = vmatpush1.msra.mxu0 %v51
    %270 = vmatprep.subr.mxu0 0.0
    %271 = vmatpush1.msra.mxu0 %v52
    %272 = vmatprep.subr.mxu0 0.0
    %273 = vmatpush1.msra.mxu0 %v53
    %274 = vmatprep.subr.mxu0 0.0
    %275 = vmatpush1.msra.mxu0 %v54
    %276 = vmatprep.subr.mxu0 0.0
    %277 = vmatpush1.msra.mxu0 %v55
    %278 = vmatprep.subr.mxu0 0.0
    %279 = vmatpush1.msra.mxu0 %v56
    %280 = vmatprep.subr.mxu0 0.0
    %281 = vmatpush1.msra.mxu0 %v57
    %282 = vmatprep.subr.mxu0 0.0
    %283 = vmatpush1.msra.mxu0 %v58
    %284 = vmatprep.subr.mxu0 0.0
    %285 = vmatpush1.msra.mxu0 0.0
    %286 = vmatprep.subr.mxu0 0.0
    %287 = vmatpush1.msra.mxu0 0.0
    %288 = vmatprep.subr.mxu0 0.0
    %289 = vmatpush1.msra.mxu0 0.0
    %290 = vmatprep.subr.mxu0 0.0
    %291 = vmatpush1.msra.mxu0 0.0
    %292 = vmatprep.subr.mxu0 0.0
    %293 = vmatpush1.msra.mxu0 0.0
    %294 = vmatprep.subr.mxu0 0.0
    %295 = vmatpush1.msra.mxu0 0.0
    %296 = vmatprep.subr.mxu0 0.0
    %297 = vmatpush1.msra.mxu0 0.0
    %298 = vmatprep.subr.mxu0 0.0
    %299 = vmatpush1.msra.mxu0 0.0
    %300 = vmatprep.subr.mxu0 0.0
    %301 = vmatpush1.msra.mxu0 0.0
    %302 = vmatprep.subr.mxu0 0.0
    %303 = vmatpush1.msra.mxu0 0.0
    %304 = vmatprep.subr.mxu0 0.0
    %305 = vmatpush1.msra.mxu0 0.0
    %306 = vmatprep.subr.mxu0 0.0
    %307 = vmatpush1.msra.mxu0 0.0
    %308 = vmatprep.subr.mxu0 0.0
    %309 = vmatpush1.msra.mxu0 0.0
    %310 = vmatprep.subr.mxu0 0.0
    %311 = vmatpush1.msra.mxu0 0.0
    %312 = vmatprep.subr.mxu0 0.0
    %313 = vmatpush1.msra.mxu0 0.0
    %314 = vmatprep.subr.mxu0 0.0
    %315 = vmatpush1.msra.mxu0 0.0
    %316 = vmatprep.mubr.f32.mxu0 0.0
    %317 = vmatmul.mubr.f32.gmra.mrb[0].mxu0 %v163
    %v318 = vpop.f32.mrb[0].mxu0
    %v319 = vadd.f32 %v67, %v318
    %v320 = vpop.f32.mrb[0].mxu0
    %321 = vdwg.mxu0
    %322 = vadd.xlane.f32.xlu0 %v319
    %v323 = vpop.xlane.xlu0 %322
    %v324 = vmul.f32 %v323, 0.03125
    %v325 = vmul.f32 %v319, %v319
    %326 = vadd.xlane.f32.xlu0 %v325
    %v327 = vpop.xlane.xlu0 %326
    %v328 = vmul.f32 %v327, 0.03125
    %v329 = vmul.f32 %v324, %v324
    %v330 = vsub.f32 %v328, %v329
    %v331 = vmax.f32 %v330, 0.0
    %v332 = vsub.f32 %v319, %v324
    %v333 = vadd.f32 %v331, 1e-05
    %v334 = vrsqrt.pop %v333
    %v335 = vmul.f32 %v332, %v334
    %v336 = vmul.f32 %v335, %v155
    %v337 = vadd.f32 %v336, %v160
    %v338 = vmax.f32 %v337, 0.0
    %v339 = vadd.f32 %v163, %v338
    %340 = vmatprep.subr.mxu0 0.0
    %341 = vmatpush1.msra.mxu0 %v43
    %342 = vmatprep.subr.mxu0 0.0
    %343 = vmatpush1.msra.mxu0 %v44
    %344 = vmatprep.subr.mxu0 0.0
    %345 = vmatpush1.msra.mxu0 %v45
    %346 = vmatprep.subr.mxu0 0.0
    %347 = vmatpush1.msra.mxu0 %v46
    %348 = vmatprep.subr.mxu0 0.0
    %349 = vmatpush1.msra.mxu0 %v47
    %350 = vmatprep.subr.mxu0 0.0
    %351 = vmatpush1.msra.mxu0 %v48
    %352 = vmatprep.subr.mxu0 0.0
    %353 = vmatpush1.msra.mxu0 %v49
    %354 = vmatprep.subr.mxu0 0.0
    %355 = vmatpush1.msra.mxu0 %v50
    %356 = vmatprep.subr.mxu0 0.0
    %357 = vmatpush1.msra.mxu0 %v51
    %358 = vmatprep.subr.mxu0 0.0
    %359 = vmatpush1.msra.mxu0 %v52
    %360 = vmatprep.subr.mxu0 0.0
    %361 = vmatpush1.msra.mxu0 %v53
    %362 = vmatprep.subr.mxu0 0.0
    %363 = vmatpush1.msra.mxu0 %v54
    %364 = vmatprep.subr.mxu0 0.0
    %365 = vmatpush1.msra.mxu0 %v55
    %366 = vmatprep.subr.mxu0 0.0
    %367 = vmatpush1.msra.mxu0 %v56
    %368 = vmatprep.subr.mxu0 0.0
    %369 = vmatpush1.msra.mxu0 %v57
    %370 = vmatprep.subr.mxu0 0.0
    %371 = vmatpush1.msra.mxu0 %v58
    %372 = vmatprep.subr.mxu0 0.0
    %373 = vmatpush1.msra.mxu0 0.0
    %374 = vmatprep.subr.mxu0 0.0
    %375 = vmatpush1.msra.mxu0 0.0
    %376 = vmatprep.subr.mxu0 0.0
    %377 = vmatpush1.msra.mxu0 0.0
    %378 = vmatprep.subr.mxu0 0.0
    %379 = vmatpush1.msra.mxu0 0.0
    %380 = vmatprep.subr.mxu0 0.0
    %381 = vmatpush1.msra.mxu0 0.0
    %382 = vmatprep.subr.mxu0 0.0
    %383 = vmatpush1.msra.mxu0 0.0
    %384 = vmatprep.subr.mxu0 0.0
    %385 = vmatpush1.msra.mxu0 0.0
    %386 = vmatprep.subr.mxu0 0.0
    %387 = vmatpush1.msra.mxu0 0.0
    %388 = vmatprep.subr.mxu0 0.0
    %389 = vmatpush1.msra.mxu0 0.0
    %390 = vmatprep.subr.mxu0 0.0
    %391 = vmatpush1.msra.mxu0 0.0
    %392 = vmatprep.subr.mxu0 0.0
    %393 = vmatpush1.msra.mxu0 0.0
    %394 = vmatprep.subr.mxu0 0.0
    %395 = vmatpush1.msra.mxu0 0.0
    %396 = vmatprep.subr.mxu0 0.0
    %397 = vmatpush1.msra.mxu0 0.0
    %398 = vmatprep.subr.mxu0 0.0
    %399 = vmatpush1.msra.mxu0 0.0
    %400 = vmatprep.subr.mxu0 0.0
    %401 = vmatpush1.msra.mxu0 0.0
    %402 = vmatprep.subr.mxu0 0.0
    %403 = vmatpush1.msra.mxu0 0.0
    %404 = vmatprep.mubr.f32.mxu0 0.0
    %405 = vmatmul.mubr.f32.gmra.mrb[0].mxu0 %v251
    %v406 = vpop.f32.mrb[0].mxu0
    %v407 = vadd.f32 %v67, %v406
    %v408 = vpop.f32.mrb[0].mxu0
    %409 = vdwg.mxu0
    %410 = vadd.xlane.f32.xlu0 %v407
    %v411 = vpop.xlane.xlu0 %410
    %v412 = vmul.f32 %v411, 0.03125
    %v413 = vmul.f32 %v407, %v407
    %414 = vadd.xlane.f32.xlu0 %v413
    %v415 = vpop.xlane.xlu0 %414
    %v416 = vmul.f32 %v415, 0.03125
    %v417 = vmul.f32 %v412, %v412
    %v418 = vsub.f32 %v416, %v417
    %v419 = vmax.f32 %v418, 0.0
    %v420 = vsub.f32 %v407, %v412
    %v421 = vadd.f32 %v419, 1e-05
    %v422 = vrsqrt.pop %v421
    %v423 = vmul.f32 %v420, %v422
    %v424 = vmul.f32 %v423, %v155
    %v425 = vadd.f32 %v424, %v160
    %v426 = vmax.f32 %v425, 0.0
    %v427 = vadd.f32 %v251, %v426
    %428 = vmatprep.subr.mxu0 0.0
    %429 = vmatpush1.msra.mxu0 %v43
    %430 = vmatprep.subr.mxu0 0.0
    %431 = vmatpush1.msra.mxu0 %v44
    %432 = vmatprep.subr.mxu0 0.0
    %433 = vmatpush1.msra.mxu0 %v45
    %434 = vmatprep.subr.mxu0 0.0
    %435 = vmatpush1.msra.mxu0 %v46
    %436 = vmatprep.subr.mxu0 0.0
    %437 = vmatpush1.msra.mxu0 %v47
    %438 = vmatprep.subr.mxu0 0.0
    %439 = vmatpush1.msra.mxu0 %v48
    %440 = vmatprep.subr.mxu0 0.0
    %441 = vmatpush1.msra.mxu0 %v49
    %442 = vmatprep.subr.mxu0 0.0
    %443 = vmatpush1.msra.mxu0 %v50
    %444 = vmatprep.subr.mxu0 0.0
    %445 = vmatpush1.msra.mxu0 %v51
    %446 = vmatprep.subr.mxu0 0.0
    %447 = vmatpush1.msra.mxu0 %v52
    %448 = vmatprep.subr.mxu0 0.0
    %449 = vmatpush1.msra.mxu0 %v53
    %450 = vmatprep.subr.mxu0 0.0
    %451 = vmatpush1.msra.mxu0 %v54
    %452 = vmatprep.subr.mxu0 0.0
    %453 = vmatpush1.msra.mxu0 %v55
    %454 = vmatprep.subr.mxu0 0.0
    %455 = vmatpush1.msra.mxu0 %v56
    %456 = vmatprep.subr.mxu0 0.0
    %457 = vmatpush1.msra.mxu0 %v57
    %458 = vmatprep.subr.mxu0 0.0
    %459 = vmatpush1.msra.mxu0 %v58
    %460 = vmatprep.subr.mxu0 0.0
    %461 = vmatpush1.msra.mxu0 0.0
    %462 = vmatprep.subr.mxu0 0.0
    %463 = vmatpush1.msra.mxu0 0.0
    %464 = vmatprep.subr.mxu0 0.0
    %465 = vmatpush1.msra.mxu0 0.0
    %466 = vmatprep.subr.mxu0 0.0
    %467 = vmatpush1.msra.mxu0 0.0
    %468 = vmatprep.subr.mxu0 0.0
    %469 = vmatpush1.msra.mxu0 0.0
    %470 = vmatprep.subr.mxu0 0.0
    %471 = vmatpush1.msra.mxu0 0.0
    %472 = vmatprep.subr.mxu0 0.0
    %473 = vmatpush1.msra.mxu0 0.0
    %474 = vmatprep.subr.mxu0 0.0
    %475 = vmatpush1.msra.mxu0 0.0
    %476 = vmatprep.subr.mxu0 0.0
    %477 = vmatpush1.msra.mxu0 0.0
    %478 = vmatprep.subr.mxu0 0.0
    %479 = vmatpush1.msra.mxu0 0.0
    %480 = vmatprep.subr.mxu0 0.0
    %481 = vmatpush1.msra.mxu0 0.0
    %482 = vmatprep.subr.mxu0 0.0
    %483 = vmatpush1.msra.mxu0 0.0
    %484 = vmatprep.subr.mxu0 0.0
    %485 = vmatpush1.msra.mxu0 0.0
    %486 = vmatprep.subr.mxu0 0.0
    %487 = vmatpush1.msra.mxu0 0.0
    %488 = vmatprep.subr.mxu0 0.0
    %489 = vmatpush1.msra.mxu0 0.0
    %490 = vmatprep.subr.mxu0 0.0
    %491 = vmatpush1.msra.mxu0 0.0
    %492 = vmatprep.mubr.f32.mxu0 0.0
    %493 = vmatmul.mubr.f32.gmra.mrb[0].mxu0 %v339
    %v494 = vpop.f32.mrb[0].mxu0
    %v495 = vadd.f32 %v67, %v494
    %v496 = vpop.f32.mrb[0].mxu0
    %497 = vdwg.mxu0
    %498 = vadd.xlane.f32.xlu0 %v495
    %v499 = vpop.xlane.xlu0 %498
    %v500 = vmul.f32 %v499, 0.03125
    %v501 = vmul.f32 %v495, %v495
    %502 = vadd.xlane.f32.xlu0 %v501
    %v503 = vpop.xlane.xlu0 %502
    %v504 = vmul.f32 %v503, 0.03125
    %v505 = vmul.f32 %v500, %v500
    %v506 = vsub.f32 %v504, %v505
    %v507 = vmax.f32 %v506, 0.0
    %v508 = vsub.f32 %v495, %v500
    %v509 = vadd.f32 %v507, 1e-05
    %v510 = vrsqrt.pop %v509
    %v511 = vmul.f32 %v508, %v510
    %v512 = vmul.f32 %v511, %v155
    %v513 = vadd.f32 %v512, %v160
    %v514 = vmax.f32 %v513, 0.0
    %v515 = vadd.f32 %v339, %v514
    %516 = vmatprep.subr.mxu0 0.0
    %517 = vmatpush1.msra.mxu0 %v43
    %518 = vmatprep.subr.mxu0 0.0
    %519 = vmatpush1.msra.mxu0 %v44
    %520 = vmatprep.subr.mxu0 0.0
    %521 = vmatpush1.msra.mxu0 %v45
    %522 = vmatprep.subr.mxu0 0.0
    %523 = vmatpush1.msra.mxu0 %v46
    %524 = vmatprep.subr.mxu0 0.0
    %525 = vmatpush1.msra.mxu0 %v47
    %526 = vmatprep.subr.mxu0 0.0
    %527 = vmatpush1.msra.mxu0 %v48
    %528 = vmatprep.subr.mxu0 0.0
    %529 = vmatpush1.msra.mxu0 %v49
    %530 = vmatprep.subr.mxu0 0.0
    %531 = vmatpush1.msra.mxu0 %v50
    %532 = vmatprep.subr.mxu0 0.0
    %533 = vmatpush1.msra.mxu0 %v51
    %534 = vmatprep.subr.mxu0 0.0
    %535 = vmatpush1.msra.mxu0 %v52
    %536 = vmatprep.subr.mxu0 0.0
    %537 = vmatpush1.msra.mxu0 %v53
    %538 = vmatprep.subr.mxu0 0.0
    %539 = vmatpush1.msra.mxu0 %v54
    %540 = vmatprep.subr.mxu0 0.0
    %541 = vmatpush1.msra.mxu0 %v55
    %542 = vmatprep.subr.mxu0 0.0
    %543 = vmatpush1.msra.mxu0 %v56
    %544 = vmatprep.subr.mxu0 0.0
    %545 = vmatpush1.msra.mxu0 %v57
    %546 = vmatprep.subr.mxu0 0.0
    %547 = vmatpush1.msra.mxu0 %v58
    %548 = vmatprep.subr.mxu0 0.0
    %549 = vmatpush1.msra.mxu0 0.0
    %550 = vmatprep.subr.mxu0 0.0
    %551 = vmatpush1.msra.mxu0 0.0
    %552 = vmatprep.subr.mxu0 0.0
    %553 = vmatpush1.msra.mxu0 0.0
    %554 = vmatprep.subr.mxu0 0.0
    %555 = vmatpush1.msra.mxu0 0.0
    %556 = vmatprep.subr.mxu0 0.0
    %557 = vmatpush1.msra.mxu0 0.0
    %558 = vmatprep.subr.mxu0 0.0
    %559 = vmatpush1.msra.mxu0 0.0
    %560 = vmatprep.subr.mxu0 0.0
    %561 = vmatpush1.msra.mxu0 0.0
    %562 = vmatprep.subr.mxu0 0.0
    %563 = vmatpush1.msra.mxu0 0.0
    %564 = vmatprep.subr.mxu0 0.0
    %565 = vmatpush1.msra.mxu0 0.0
    %566 = vmatprep.subr.mxu0 0.0
    %567 = vmatpush1.msra.mxu0 0.0
    %568 = vmatprep.subr.mxu0 0.0
    %569 = vmatpush1.msra.mxu0 0.0
    %570 = vmatprep.subr.mxu0 0.0
    %571 = vmatpush1.msra.mxu0 0.0
    %572 = vmatprep.subr.mxu0 0.0
    %573 = vmatpush1.msra.mxu0 0.0
    %574 = vmatprep.subr.mxu0 0.0
    %575 = vmatpush1.msra.mxu0 0.0
    %576 = vmatprep.subr.mxu0 0.0
    %577 = vmatpush1.msra.mxu0 0.0
    %578 = vmatprep.subr.mxu0 0.0
    %579 = vmatpush1.msra.mxu0 0.0
    %580 = vmatprep.mubr.f32.mxu0 0.0
    %581 = vmatmul.mubr.f32.gmra.mrb[0].mxu0 %v427
    %v582 = vpop.f32.mrb[0].mxu0
    %v583 = vadd.f32 %v67, %v582
    %v584 = vpop.f32.mrb[0].mxu0
    %585 = vdwg.mxu0
    %586 = vadd.xlane.f32.xlu0 %v583
    %v587 = vpop.xlane.xlu0 %586
    %v588 = vmul.f32 %v587, 0.03125
    %v589 = vmul.f32 %v583, %v583
    %590 = vadd.xlane.f32.xlu0 %v589
    %v591 = vpop.xlane.xlu0 %590
    %v592 = vmul.f32 %v591, 0.03125
    %v593 = vmul.f32 %v588, %v588
    %v594 = vsub.f32 %v592, %v593
    %v595 = vmax.f32 %v594, 0.0
    %v596 = vsub.f32 %v583, %v588
    %v597 = vadd.f32 %v595, 1e-05
    %v598 = vrsqrt.pop %v597
    %v599 = vmul.f32 %v596, %v598
    %v600 = vmul.f32 %v599, %v155
    %v601 = vadd.f32 %v600, %v160
    %v602 = vmax.f32 %v601, 0.0
    %v603 = vadd.f32 %v427, %v602
    %604 = vst [vmem:[#allocation7] sm:$0xff] %v515
    %605 = vst [vmem:[#allocation7 + $0x8] sm:$0xff] %v603
    // Predicated region
    $region22: #{tpu_custom_call.1} parent=1 // pred_check
      _
    $region23: #{tpu_custom_call.1} parent=1 // pred_check_branch
      %607 = sbr.rel (0) target = $region25
    $region24: #{tpu_custom_call.1} parent=1 // pred_region
      %s609 = ssub.s32 256, 256
      %610 = vsyncadd [#allocation4], %s609
      %s611 = sshll.u32 [#allocation7], 4
      %s612 = int_to_ptr.vmem [resolvable:$true] %s611
      %617 = dma.vmem_to_hbm [thread:$0]  %s612, 256, %s3, [#allocation4], 128, 128, 8
    $region25: #{tpu_custom_call.1} parent=1 // pred_fallthru
      _
    // Predicated region
    $region26: #{tpu_custom_call.1} parent=1 // pred_check
      _
    $region27: #{tpu_custom_call.1} parent=1 // pred_check_branch
      %619 = sbr.rel (0) target = $region29
    $region28: #{tpu_custom_call.1} parent=1 // pred_region
      %620 = dma.done [#allocation4], 256
    $region29: #{tpu_custom_call.1} parent=1 // pred_fallthru
      _
    %621 = vsyncpa [#allocation3], 1
    %622 = vsyncpa [#allocation6], 1
    %623 = vsyncpa [#allocation4], 1

</llo_original>
